<compile_context>
chip_gen: v7x
topology: tpu7x:2x2x1
jax: 0.10.0
libtpu: 0.0.40
codegen_flags: <defaults>
</compile_context>

<pallas_src>
import jax
import jax.numpy as jnp
from jax.experimental import pallas as pl
from jax.experimental.pallas import tpu as pltpu


def _round_up(x, m):
    return ((x + m - 1) // m) * m


def _cdiv(a, b):
    return (a + b - 1) // b


# ----------------------------------------------------------------------------
# Kernel: one batch tile per grid step; weights/biases resident at block (0, 0).
# ----------------------------------------------------------------------------
def simple_nn_kernel(x_ref, w1_ref, b1_ref, w2_ref, b2_ref, out_ref):
    # x_ref : (TM, In)       f32   VMEM (batch tile, original dtype)
    # w1_ref: (In, Hid_p)    bf16  VMEM (fc1.weight.T, zero-padded on Hid)
    # b1_ref: (1, Hid_p)     f32   VMEM
    # w2_ref: (Hid_p, Out)   bf16  VMEM (fc2.weight.T, zero rows for padded Hid)
    # b2_ref: (1, Out)       f32   VMEM
    # out_ref:(TM, Out)      f32   VMEM (unpadded output, no wrapper slice pass)

    # Fused dtype cast: read f32 once from HBM, cast to bf16 on-chip (hides
    # under the DMA/MXU instead of costing a separate XLA pass over x).
    x = x_ref[...].astype(w1_ref.dtype)

    # fc1: bf16 MXU matmul, f32 accumulation; bias + ReLU in f32 on the VPU.
    h = jnp.dot(x, w1_ref[...], preferred_element_type=jnp.float32)
    h = jnp.maximum(h + b1_ref[...], 0.0)

    # fc2: cast activation to bf16 for the MXU, accumulate in f32.
    y = jnp.dot(h.astype(w2_ref.dtype), w2_ref[...],
                preferred_element_type=jnp.float32)
    y = y + b2_ref[...]

    out_ref[...] = y.astype(out_ref.dtype)


# ----------------------------------------------------------------------------
# One-time parameter preparation (NOT in the per-call hot path):
#   PyTorch layout (Hid, In)/(Out, Hid) -> (In, Hid_p)/(Hid_p, Out), bf16,
#   Hid zero-padded to a multiple of 128 (lane-dense hidden activation).
#   Out is intentionally NOT padded (small-width masked store beats 8x writeback).
# ----------------------------------------------------------------------------
def prepare_params(w1, b1, w2, b2, *, compute_dtype=jnp.bfloat16):
    hid, inp = w1.shape
    out = w2.shape[0]
    hid_p = _round_up(hid, 128)

    w1_t = jnp.zeros((inp, hid_p), compute_dtype)
    w1_t = w1_t.at[:, :hid].set(w1.T.astype(compute_dtype))
    b1_p = jnp.zeros((1, hid_p), jnp.float32).at[:, :hid].set(b1)

    w2_t = jnp.zeros((hid_p, out), compute_dtype)
    w2_t = w2_t.at[:hid, :].set(w2.T.astype(compute_dtype))
    b2_p = b2.reshape(1, out).astype(jnp.float32)

    return w1_t, b1_p, w2_t, b2_p


def _resident_spec(shape):
    """BlockSpec for a grid-invariant (VMEM-resident) operand.

    Single-buffered when the API supports it: the index_map is constant, so a
    second pipeline buffer is pure VMEM waste (matters on v7x's 64 MiB VMEM
    once weights grow)."""
    index_map = lambda i: (0, 0)
    if hasattr(pl, "Buffered"):
        try:
            return pl.BlockSpec(shape, index_map, pipeline_mode=pl.Buffered(1))
        except (TypeError, ValueError):
            pass
    return pl.BlockSpec(shape, index_map)


# ----------------------------------------------------------------------------
# Forward wrapper: batch-tiled pallas_call with resident weights.
# ----------------------------------------------------------------------------
def simple_nn_forward(x, w1_t, b1_p, w2_t, b2_p, *, tm=512):
    B, inp = x.shape
    inp_w, hid_p = w1_t.shape
    out = w2_t.shape[1]
    assert inp == inp_w, "input feature mismatch"
    w_isz = jnp.dtype(w1_t.dtype).itemsize
    x_isz = jnp.dtype(x.dtype).itemsize

    # ---- batch tiling ------------------------------------------------------
    b8 = _round_up(B, 8)
    tm = _round_up(min(tm, b8), 8)
    n_tiles = _cdiv(b8, tm)
    # Rebalance tile size so batch-padding waste stays bounded (<~8 rows/tile).
    tm = _round_up(_cdiv(b8, n_tiles), 8)
    # v7x has 2 TensorCores: give the "parallel" axis >=2 steps when the batch
    # is big enough to matter; tiny batches keep a single step (per-step
    # overhead ~0.35us is not worth it there, and v5e/v6e have 1 TC anyway).
    if n_tiles == 1 and b8 >= 256:
        n_tiles = 2
        tm = _round_up(_cdiv(b8, 2), 8)
    b_pad = n_tiles * tm

    x_p = x if b_pad == B else jnp.pad(x, ((0, b_pad - B), (0, 0)))
    grid = (n_tiles,)

    # ---- advisory cost estimate -------------------------------------------
    flops = 2 * b_pad * inp * hid_p + 2 * b_pad * hid_p * out
    bytes_accessed = (b_pad * inp * x_isz
                      + (inp * hid_p + hid_p * out) * w_isz
                      + (hid_p + out) * 4
                      + b_pad * out * 4)

    # ---- generation-aware VMEM budget --------------------------------------
    wbuf = 1 if hasattr(pl, "Buffered") else 2   # weight buffer count
    vmem_need = (2 * tm * inp * x_isz                       # x tiles (dbl-buf)
                 + 2 * tm * out * 4                          # out tiles (dbl-buf)
                 + wbuf * ((inp * hid_p + hid_p * out) * w_isz
                           + (hid_p + out) * 4)              # resident weights
                 + tm * inp * w_isz                          # bf16 x copy
                 + tm * hid_p * (4 + w_isz)                  # h in f32 + bf16
                 + tm * out * 4)                             # y
    try:
        vmem_cap = int(pltpu.get_tpu_info().vmem_capacity_bytes)
    except Exception:
        vmem_cap = 64 * 2 ** 20   # v7x per-TC VMEM: safe lower bound
    vmem_limit = int(min(int(0.75 * vmem_cap),
                         max(2 * vmem_need, 16 * 2 ** 20)))

    out_arr = pl.pallas_call(
        simple_nn_kernel,
        out_shape=jax.ShapeDtypeStruct((b_pad, out), jnp.float32),
        grid=grid,
        in_specs=[
            pl.BlockSpec((tm, inp), lambda i: (i, 0)),  # x batch tile (f32)
            _resident_spec((inp, hid_p)),               # W1^T (resident)
            _resident_spec((1, hid_p)),                 # b1   (resident)
            _resident_spec((hid_p, out)),               # W2^T (resident)
            _resident_spec((1, out)),                   # b2   (resident)
        ],
        out_specs=pl.BlockSpec((tm, out), lambda i: (i, 0)),
        compiler_params=pltpu.CompilerParams(
            dimension_semantics=("parallel",),
            vmem_limit_bytes=vmem_limit),
        cost_estimate=pl.CostEstimate(
            flops=int(flops), transcendentals=0,
            bytes_accessed=int(bytes_accessed)),
    )(x_p, w1_t, b1_p, w2_t, b2_p)

    # Only batch padding (if any) needs stripping; output width is exact.
    return out_arr if b_pad == B else out_arr[:B]


def init_params(key, input_size, hidden_size, output_size):
    """Deterministic init mimicking nn.Linear's uniform(-1/sqrt(fan_in), ...)."""
    k1, k2, k3, k4 = jax.random.split(key, 4)
    bound1 = 1.0 / jnp.sqrt(input_size)
    bound2 = 1.0 / jnp.sqrt(hidden_size)
    w1 = jax.random.uniform(k1, (hidden_size, input_size),
                            jnp.float32, -bound1, bound1)
    b1 = jax.random.uniform(k2, (hidden_size,), jnp.float32, -bound1, bound1)
    w2 = jax.random.uniform(k3, (output_size, hidden_size),
                            jnp.float32, -bound2, bound2)
    b2 = jax.random.uniform(k4, (output_size,), jnp.float32, -bound2, bound2)
    return w1, b1, w2, b2


if __name__ == "__main__":
    batch, input_size, hidden_size, output_size = 8, 32, 64, 16

    key = jax.random.PRNGKey(0)
    kx, kp = jax.random.split(key)
    x = jax.random.normal(kx, (batch, input_size), jnp.float32)
    w1, b1, w2, b2 = init_params(kp, input_size, hidden_size, output_size)

    # One-time weight layout prep (transpose + hidden-lane padding + bf16 cast).
    w1_t, b1_p, w2_t, b2_p = prepare_params(w1, b1, w2, b2)

    fwd = jax.jit(simple_nn_forward)
    out = jax.block_until_ready(fwd(x, w1_t, b1_p, w2_t, b2_p))

    # Reference 1: same bf16-operand / f32-accumulate math as the kernel.
    ref_h = jnp.maximum(
        jnp.dot(x.astype(jnp.bfloat16), w1.T.astype(jnp.bfloat16),
                preferred_element_type=jnp.float32) + b1, 0.0)
    ref = jnp.dot(ref_h.astype(jnp.bfloat16), w2.T.astype(jnp.bfloat16),
                  preferred_element_type=jnp.float32) + b2

    # Reference 2: full-precision PyTorch-equivalent forward (looser tolerance).
    ref_f32 = jnp.maximum(x @ w1.T + b1, 0.0) @ w2.T + b2

    assert out.shape == (batch, output_size)
    assert out.dtype == jnp.float32
    assert jnp.allclose(out, ref, atol=1e-2, rtol=1e-2)
    assert jnp.allclose(out, ref_f32, atol=5e-2, rtol=5e-2)

    print("KERNEL_OK")
</pallas_src>

<mosaic_0001>
module attributes {stable_mosaic.version = 11 : i64} {
  func.func @simple_nn_kernel(%arg0: i32, %arg1: memref<8x32xf32, #tpu.memory_space<vmem>>, %arg2: memref<32x128xbf16, #tpu.memory_space<vmem>>, %arg3: memref<1x128xf32, #tpu.memory_space<vmem>>, %arg4: memref<128x16xbf16, #tpu.memory_space<vmem>>, %arg5: memref<1x16xf32, #tpu.memory_space<vmem>>, %arg6: memref<8x16xf32, #tpu.memory_space<vmem>>) attributes {dimension_semantics = [#tpu.dimension_semantics<parallel>], iteration_bounds = array<i64: 1>, scalar_prefetch = 0 : i64, scratch_operands = 0 : i64, tpu.core_type = #tpu.core_type<tc>, window_params = [{transform_indices = @transform_0, window_bounds = array<i64: 8, 32>}, {pipeline_mode = #tpu.pipeline_mode<synchronous>, transform_indices = @transform_1, window_bounds = array<i64: 32, 128>}, {pipeline_mode = #tpu.pipeline_mode<synchronous>, transform_indices = @transform_2, window_bounds = array<i64: 1, 128>}, {pipeline_mode = #tpu.pipeline_mode<synchronous>, transform_indices = @transform_3, window_bounds = array<i64: 128, 16>}, {pipeline_mode = #tpu.pipeline_mode<synchronous>, transform_indices = @transform_4, window_bounds = array<i64: 1, 16>}, {transform_indices = @transform_5, window_bounds = array<i64: 8, 16>}]} {
    %c0 = arith.constant 0 : index
    %c0_0 = arith.constant 0 : index
    %0 = vector.load %arg1[%c0, %c0_0] : memref<8x32xf32, #tpu.memory_space<vmem>>, vector<8x32xf32>
    %1 = arith.truncf %0 : vector<8x32xf32> to vector<8x32xbf16>
    %c0_1 = arith.constant 0 : index
    %c0_2 = arith.constant 0 : index
    %2 = vector.load %arg2[%c0_1, %c0_2] : memref<32x128xbf16, #tpu.memory_space<vmem>>, vector<32x128xbf16>
    %cst = arith.constant dense<0.000000e+00> : vector<8x128xf32>
    %3 = tpu.matmul %1, %2, %cst {dimension_numbers = #tpu.dot_dimension_numbers<[1], [0], [0], [1], [0, 0, 1, 1], [], []>} : vector<8x32xbf16>, vector<32x128xbf16>, vector<8x128xf32> -> vector<8x128xf32>
    %c0_3 = arith.constant 0 : index
    %c0_4 = arith.constant 0 : index
    %4 = vector.load %arg3[%c0_3, %c0_4] : memref<1x128xf32, #tpu.memory_space<vmem>>, vector<1x128xf32>
    %5 = vector.broadcast %4 : vector<1x128xf32> to vector<8x128xf32>
    %6 = arith.addf %3, %5 : vector<8x128xf32>
    %cst_5 = arith.constant 0.000000e+00 : f32
    %7 = vector.broadcast %cst_5 : f32 to vector<8x128xf32>
    %8 = arith.maximumf %6, %7 : vector<8x128xf32>
    %9 = arith.truncf %8 : vector<8x128xf32> to vector<8x128xbf16>
    %c0_6 = arith.constant 0 : index
    %c0_7 = arith.constant 0 : index
    %10 = vector.load %arg4[%c0_6, %c0_7] : memref<128x16xbf16, #tpu.memory_space<vmem>>, vector<128x16xbf16>
    %cst_8 = arith.constant dense<0.000000e+00> : vector<8x16xf32>
    %11 = tpu.matmul %9, %10, %cst_8 {dimension_numbers = #tpu.dot_dimension_numbers<[1], [0], [0], [1], [0, 0, 1, 1], [], []>} : vector<8x128xbf16>, vector<128x16xbf16>, vector<8x16xf32> -> vector<8x16xf32>
    %c0_9 = arith.constant 0 : index
    %c0_10 = arith.constant 0 : index
    %12 = vector.load %arg5[%c0_9, %c0_10] : memref<1x16xf32, #tpu.memory_space<vmem>>, vector<1x16xf32>
    %13 = vector.broadcast %12 : vector<1x16xf32> to vector<8x16xf32>
    %14 = arith.addf %11, %13 : vector<8x16xf32>
    %c0_11 = arith.constant 0 : index
    %c0_12 = arith.constant 0 : index
    %15 = vector.load %arg6[%c0_11, %c0_12] : memref<8x16xf32, #tpu.memory_space<vmem>>, vector<8x16xf32>
    tpu.vector_store %arg6[%c0_11, %c0_12], %14 {strides = array<i32>} : memref<8x16xf32, #tpu.memory_space<vmem>>, vector<8x16xf32>,
    return
  }
  func.func @transform_0(%arg0: i32) -> (i32, i32) {
    %c0_i32 = arith.constant 0 : i32
    %c0_i32_0 = arith.constant 0 : i32
    return %arg0, %c0_i32 : i32, i32
  }
  func.func @transform_1(%arg0: i32) -> (i32, i32) {
    %c0_i32 = arith.constant 0 : i32
    %c0_i32_0 = arith.constant 0 : i32
    %c0_i32_1 = arith.constant 0 : i32
    return %c0_i32, %c0_i32_0 : i32, i32
  }
  func.func @transform_2(%arg0: i32) -> (i32, i32) {
    %c0_i32 = arith.constant 0 : i32
    %c0_i32_0 = arith.constant 0 : i32
    %c0_i32_1 = arith.constant 0 : i32
    return %c0_i32, %c0_i32_0 : i32, i32
  }
  func.func @transform_3(%arg0: i32) -> (i32, i32) {
    %c0_i32 = arith.constant 0 : i32
    %c0_i32_0 = arith.constant 0 : i32
    %c0_i32_1 = arith.constant 0 : i32
    return %c0_i32, %c0_i32_0 : i32, i32
  }
  func.func @transform_4(%arg0: i32) -> (i32, i32) {
    %c0_i32 = arith.constant 0 : i32
    %c0_i32_0 = arith.constant 0 : i32
    %c0_i32_1 = arith.constant 0 : i32
    return %c0_i32, %c0_i32_0 : i32, i32
  }
  func.func @transform_5(%arg0: i32) -> (i32, i32) {
    %c0_i32 = arith.constant 0 : i32
    %c0_i32_0 = arith.constant 0 : i32
    return %arg0, %c0_i32 : i32, i32
  }
}

</mosaic_0001>

<llo_original>
// kernel: simple_nn_forward.1
$region0: #{simple_nn_forward.1}
  #allocation0 [shape = 'u32[]', space=smem, size = 0x4, offset = 0x4, fixed_abs, tag = 'smem constant byte address 0x4 - core index']
  #allocation1 [shape = 'u32[144,128]{1,0:T(1,128)}', space=vmem, size = 0x12000, scoped, tag = 'internal scratch']
  %s0 = inlined_call_operand.vmem [shape: f32[8,32], index: 0, kind: input, shape index: {}]
  %s1 = inlined_call_operand.vmem [shape: bf16[32,128], index: 1, kind: input, shape index: {}]
  %s2 = inlined_call_operand.vmem [shape: f32[1,128], index: 2, kind: input, shape index: {}]
  %s3 = inlined_call_operand.vmem [shape: bf16[128,16], index: 3, kind: input, shape index: {}]
  %s4 = inlined_call_operand.vmem [shape: f32[1,16], index: 4, kind: input, shape index: {}]
  %s5 = inlined_call_operand.hbm [shape: f32[8,16], index: 5, kind: output, shape index: {}]
  %s6 = sld [smem:[#allocation0]]
  $region30: #{simple_nn_forward.1} parent=0
    _
  %s8 = ssub.s32 1, %s6
  %s9 = scalar_select 0, %s8, %s6
  $region1: #{simple_nn_forward.1} parent=0
    #allocation2 [shape = 'u8[4096]{0}', space=vmem, size = 0x1000, scoped, tag = 'output window, operand 0, single buffered']
    #allocation3 [shape = 's32[1]{0}', space=sflag, size = 0x4, scoped, tag = 'scoped memory for simple_nn_forward.1']
    %10 = vsyncpa [#allocation3], 0
    // Predicated region
    $region2: #{simple_nn_forward.1} parent=1 // pred_check
      _
    $region3: #{simple_nn_forward.1} parent=1 // pred_check_branch
      %12 = sbr.rel (0) target = $region5
    $region4: #{simple_nn_forward.1} parent=1 // pred_region
      _
    $region5: #{simple_nn_forward.1} parent=1 // pred_fallthru
      _
    // Predicated region
    $region6: #{simple_nn_forward.1} parent=1 // pred_check
      _
    $region7: #{simple_nn_forward.1} parent=1 // pred_check_branch
      %14 = sbr.rel (0) target = $region9
    $region8: #{simple_nn_forward.1} parent=1 // pred_region
      _
    $region9: #{simple_nn_forward.1} parent=1 // pred_fallthru
      _
    // Predicated region
    $region10: #{simple_nn_forward.1} parent=1 // pred_check
      _
    $region11: #{simple_nn_forward.1} parent=1 // pred_check_branch
      %16 = sbr.rel (0) target = $region13
    $region12: #{simple_nn_forward.1} parent=1 // pred_region
      _
    $region13: #{simple_nn_forward.1} parent=1 // pred_fallthru
      _
    // Predicated region
    $region14: #{simple_nn_forward.1} parent=1 // pred_check
      _
    $region15: #{simple_nn_forward.1} parent=1 // pred_check_branch
      %18 = sbr.rel (0) target = $region17
    $region16: #{simple_nn_forward.1} parent=1 // pred_region
      _
    $region17: #{simple_nn_forward.1} parent=1 // pred_fallthru
      _
    // Predicated region
    $region18: #{simple_nn_forward.1} parent=1 // pred_check
      _
    $region19: #{simple_nn_forward.1} parent=1 // pred_check_branch
      %20 = sbr.rel (0) target = $region21
    $region20: #{simple_nn_forward.1} parent=1 // pred_region
      _
    $region21: #{simple_nn_forward.1} parent=1 // pred_fallthru
      _
    %v22 = vld [vmem:[%s0] sm:$0xff]
    %v23 = vpack.c.bf16 %v22, %v22
    %v24 = vld [vmem:[%s1] sm:$0xf]
    %v25 = vld [vmem:[%s1 + $0x4] sm:$0xf]
    %v26 = vld [vmem:[%s1 + $0x8] sm:$0xf]
    %v27 = vld [vmem:[%s1 + $0xc] sm:$0xf]
    %v28 = vld [vmem:[%s2] sm:$0x1]
    %v30 = vlaneseq
    %v31 = vshrl.u32 %v30, 7
    %v32 = vsub.s32 0, %v31
    %v33 = vrot.slane %v28, %v32
    %v39 = vunpack.c.l.b16 %v24
    %v40 = vunpack.c.l.b16 %v25
    %v41 = vunpack.c.l.b16 %v26
    %v42 = vunpack.c.l.b16 %v27
    %v43 = vpack.c.b16 %v40, %v39
    %v44 = vpack.c.b16 %v42, %v41
    %vm47 = vcmask 261120
    %v49 = vsel %vm47, %v23, 0
    %51 = vmatprep.subr.bf16.mxu0 0
    %52 = vmatpush1.bf16.msra.mxu0 %v43
    %53 = vmatprep.subr.bf16.mxu0 0
    %54 = vmatpush1.bf16.msra.mxu0 %v44
    %55 = vmatprep.subr.bf16.mxu0 0
    %56 = vmatpush1.bf16.msra.mxu0 0
    %57 = vmatprep.subr.bf16.mxu0 0
    %58 = vmatpush1.bf16.msra.mxu0 0
    %59 = vmatprep.subr.bf16.mxu0 0
    %60 = vmatpush1.bf16.msra.mxu0 0
    %61 = vmatprep.subr.bf16.mxu0 0
    %62 = vmatpush1.bf16.msra.mxu0 0
    %63 = vmatprep.subr.bf16.mxu0 0
    %64 = vmatpush1.bf16.msra.mxu0 0
    %65 = vmatprep.subr.bf16.mxu0 0
    %66 = vmatpush1.bf16.msra.mxu0 0
    %67 = vmatprep.subr.bf16.mxu0 0
    %68 = vmatpush1.bf16.msra.mxu0 0
    %69 = vmatprep.subr.bf16.mxu0 0
    %70 = vmatpush1.bf16.msra.mxu0 0
    %71 = vmatprep.subr.bf16.mxu0 0
    %72 = vmatpush1.bf16.msra.mxu0 0
    %73 = vmatprep.subr.bf16.mxu0 0
    %74 = vmatpush1.bf16.msra.mxu0 0
    %75 = vmatprep.subr.bf16.mxu0 0
    %76 = vmatpush1.bf16.msra.mxu0 0
    %77 = vmatprep.subr.bf16.mxu0 0
    %78 = vmatpush1.bf16.msra.mxu0 0
    %79 = vmatprep.subr.bf16.mxu0 0
    %80 = vmatpush1.bf16.msra.mxu0 0
    %81 = vmatprep.subr.bf16.mxu0 0
    %82 = vmatpush1.bf16.msra.mxu0 0
    %83 = vmatprep.mubr.bf16.mxu0 0
    %84 = vmatmul.mubr.bf16.gmra.mrb[0].mxu0 %v49
    %v85 = vpop.f32.mrb[0].mxu0
    %v86 = vadd.f32 %v33, %v85
    %v87 = vpop.f32.mrb[0].mxu0
    %v88 = vpop.f32.mrb[0].mxu0
    %v89 = vpop.f32.mrb[0].mxu0
    %90 = vdwg.mxu0
    %v91 = vmax.f32 %v86, 0.0
    %v92 = vpack.c.bf16 %v91, %v91
    %v93 = vld [vmem:[%s3] sm:$0xf]
    %v94 = vld [vmem:[%s3 + $0x4] sm:$0xf]
    %v95 = vld [vmem:[%s3 + $0x8] sm:$0xf]
    %v96 = vld [vmem:[%s3 + $0xc] sm:$0xf]
    %v97 = vld [vmem:[%s3 + $0x10] sm:$0xf]
    %v98 = vld [vmem:[%s3 + $0x14] sm:$0xf]
    %v99 = vld [vmem:[%s3 + $0x18] sm:$0xf]
    %v100 = vld [vmem:[%s3 + $0x1c] sm:$0xf]
    %v101 = vld [vmem:[%s3 + $0x20] sm:$0xf]
    %v102 = vld [vmem:[%s3 + $0x24] sm:$0xf]
    %v103 = vld [vmem:[%s3 + $0x28] sm:$0xf]
    %v104 = vld [vmem:[%s3 + $0x2c] sm:$0xf]
    %v105 = vld [vmem:[%s3 + $0x30] sm:$0xf]
    %v106 = vld [vmem:[%s3 + $0x34] sm:$0xf]
    %v107 = vld [vmem:[%s3 + $0x38] sm:$0xf]
    %v108 = vld [vmem:[%s3 + $0x3c] sm:$0xf]
    %v109 = vld [vmem:[%s4] sm:$0x1]
    %v111 = vlaneseq
    %v112 = vshrl.u32 %v111, 7
    %v113 = vsub.s32 0, %v112
    %v114 = vrot.slane %v109, %v113
    %v132 = vunpack.c.l.b16 %v93
    %v133 = vunpack.c.l.b16 %v94
    %v134 = vunpack.c.l.b16 %v95
    %v135 = vunpack.c.l.b16 %v96
    %v136 = vunpack.c.l.b16 %v97
    %v137 = vunpack.c.l.b16 %v98
    %v138 = vunpack.c.l.b16 %v99
    %v139 = vunpack.c.l.b16 %v100
    %v140 = vunpack.c.l.b16 %v101
    %v141 = vunpack.c.l.b16 %v102
    %v142 = vunpack.c.l.b16 %v103
    %v143 = vunpack.c.l.b16 %v104
    %v144 = vunpack.c.l.b16 %v105
    %v145 = vunpack.c.l.b16 %v106
    %v146 = vunpack.c.l.b16 %v107
    %v147 = vunpack.c.l.b16 %v108
    %v148 = vpack.c.b16 %v133, %v132
    %v149 = vpack.c.b16 %v135, %v134
    %v150 = vpack.c.b16 %v137, %v136
    %v151 = vpack.c.b16 %v139, %v138
    %v152 = vpack.c.b16 %v141, %v140
    %v153 = vpack.c.b16 %v143, %v142
    %v154 = vpack.c.b16 %v145, %v144
    %v155 = vpack.c.b16 %v147, %v146
    %164 = vmatprep.subr.bf16.mxu0 0
    %165 = vmatpush1.bf16.msra.mxu0 %v148
    %166 = vmatprep.subr.bf16.mxu0 0
    %167 = vmatpush1.bf16.msra.mxu0 %v149
    %168 = vmatprep.subr.bf16.mxu0 0
    %169 = vmatpush1.bf16.msra.mxu0 %v150
    %170 = vmatprep.subr.bf16.mxu0 0
    %171 = vmatpush1.bf16.msra.mxu0 %v151
    %172 = vmatprep.subr.bf16.mxu0 0
    %173 = vmatpush1.bf16.msra.mxu0 %v152
    %174 = vmatprep.subr.bf16.mxu0 0
    %175 = vmatpush1.bf16.msra.mxu0 %v153
    %176 = vmatprep.subr.bf16.mxu0 0
    %177 = vmatpush1.bf16.msra.mxu0 %v154
    %178 = vmatprep.subr.bf16.mxu0 0
    %179 = vmatpush1.bf16.msra.mxu0 %v155
    %180 = vmatprep.subr.bf16.mxu0 0
    %181 = vmatpush1.bf16.msra.mxu0 0
    %182 = vmatprep.subr.bf16.mxu0 0
    %183 = vmatpush1.bf16.msra.mxu0 0
    %184 = vmatprep.subr.bf16.mxu0 0
    %185 = vmatpush1.bf16.msra.mxu0 0
    %186 = vmatprep.subr.bf16.mxu0 0
    %187 = vmatpush1.bf16.msra.mxu0 0
    %188 = vmatprep.subr.bf16.mxu0 0
    %189 = vmatpush1.bf16.msra.mxu0 0
    %190 = vmatprep.subr.bf16.mxu0 0
    %191 = vmatpush1.bf16.msra.mxu0 0
    %192 = vmatprep.subr.bf16.mxu0 0
    %193 = vmatpush1.bf16.msra.mxu0 0
    %194 = vmatprep.subr.bf16.mxu0 0
    %195 = vmatpush1.bf16.msra.mxu0 0
    %196 = vmatprep.mubr.bf16.mxu0 0
    %197 = vmatmul.mubr.bf16.gmra.mrb[0].mxu0 %v92
    %v198 = vpop.f32.mrb[0].mxu0
    %v199 = vadd.f32 %v114, %v198
    %v200 = vpop.f32.mrb[0].mxu0
    %v201 = vpop.f32.mrb[0].mxu0
    %v202 = vpop.f32.mrb[0].mxu0
    %203 = vdwg.mxu0
    %vm204 = vcmask 130048
    %205 = vst.msk [vmem:[#allocation2] sm:$0xff] %vm204, %v199
    // Predicated region
    $region22: #{simple_nn_forward.1} parent=1 // pred_check
      _
    $region23: #{simple_nn_forward.1} parent=1 // pred_check_branch
      %207 = sbr.rel (0) target = $region25
    $region24: #{simple_nn_forward.1} parent=1 // pred_region
      %s209 = ssub.s32 128, 128
      %210 = vsyncadd [#allocation3], %s209
      %s212 = sshll.u32 [#allocation2], 4
      %s213 = int_to_ptr.vmem [resolvable:$true] %s212
      %215 = dma.vmem_to_hbm [thread:$0]  %s213, 128, %s5, [#allocation3]
    $region25: #{simple_nn_forward.1} parent=1 // pred_fallthru
      _
    // Predicated region
    $region26: #{simple_nn_forward.1} parent=1 // pred_check
      _
    $region27: #{simple_nn_forward.1} parent=1 // pred_check_branch
      %217 = sbr.rel (0) target = $region29
    $region28: #{simple_nn_forward.1} parent=1 // pred_region
      %218 = dma.done [#allocation3], 128
    $region29: #{simple_nn_forward.1} parent=1 // pred_fallthru
      _
    %219 = vsyncpa [#allocation3], 1

</llo_original>
